<compile_context>
chip_gen: v7x
topology: tpu7x:2x2x1
jax: 0.10.0
libtpu: 0.0.40
codegen_flags: <defaults>
</compile_context>

<pallas_src>
import functools

import jax
import jax.numpy as jnp
from jax.experimental import pallas as pl
from jax.experimental.pallas import tpu as pltpu


_TREE_MAX_N = 8                 # hard cutoff for the unrolled tree-select lookup
_TEMP_BYTES_PER_SITE = 32       # live i32/f32 roll + mask + tree temporaries per site
_MIN_SUBLANE_ROWS = 8


def _next_pow2(v):
    return max(2, 1 << (int(v) - 1).bit_length())


def _vmem_capacity_bytes():
    """Physical VMEM per TensorCore; conservative fallback if the query fails."""
    try:
        cap = getattr(pltpu.get_tpu_info(), "vmem_capacity_bytes", None)
        if cap:
            return int(cap)
    except Exception:
        pass
    return 64 * 1024 * 1024     # conservative (v7x-sized) fallback


def _tile_plan(batch, length, itemsize):
    """Pick batch-tile rows, output layout and the scoped-VMEM limit."""
    cap = _vmem_capacity_bytes()
    # 128 MiB chips (v5e/v6e) -> 96 MiB limit; 64 MiB (v7x) -> 48 MiB.
    vmem_limit = int(min(cap * 3 // 4, 96 * 1024 * 1024))
    # Working set per batch row: double-buffered input tile plus the full-width
    # int32/f32 temporaries that the roll + tree select materialize.
    per_row = length * (2 * itemsize + _TEMP_BYTES_PER_SITE)
    budget = cap // 2                           # leave half of VMEM as headroom
    rows = budget // per_row
    if rows >= 128:
        rows = (rows // 128) * 128              # lane-dense (1, TB) output blocks
        if batch >= 256:
            # Guarantee >=2 grid steps so ("parallel",) can use both v7x TensorCores
            # (free on single-TC v5e/v6e).
            half = (((batch + 1) // 2) + 127) // 128 * 128
            rows = min(rows, half)
    elif rows >= _MIN_SUBLANE_ROWS:
        # Big-lattice fallback: 8-row blocks, lane-sparse (TB, 1) output.
        rows = (rows // _MIN_SUBLANE_ROWS) * _MIN_SUBLANE_ROWS
    else:
        # TODO(synk): add an L-axis grid with a wrapper-side roll + per-tile f32
        # accumulation for lattices where even an 8-row block exceeds VMEM.
        raise NotImplementedError(
            f"lattice row of {length} sites x {itemsize} B exceeds the VMEM budget "
            f"({cap >> 20} MiB) even at 8 rows per tile")
    rows = min(rows, batch)
    lane_dense = (rows % 128 == 0) or (rows == batch)
    return rows, lane_dense, vmem_limit


def _twobody_kernel(x_ref, pair_ref, o_ref, *, n_vals, height, width,
                    shift_h, shift_w, lane_dense_out):
    """x_ref:    (TB, H*W)        int  flattened lattice configurations (lane-dense)
       pair_ref: (P,)             f32  pow2-padded fused pair-energy table in SMEM
       o_ref:    (1, TB)/(TB, 1)  f32  per-sample energies."""
    H, W = height, width
    L = H * W
    x = x_ref[...].astype(jnp.int32)                       # (TB, L)

    # --- input.roll(shifts, (-2, -1)), fused into a single flat roll ---------
    # rolled[i, j] = x[(i-sh) % H, (j-sw) % W].  On the row-major flat layout this
    # is one roll by sh*W + sw for lanes with j >= sw, and a roll by
    # sh*W + sw - W (in-row wrap correction) for lanes with j < sw.
    sh = shift_h % H
    sw = shift_w % W
    base = sh * W + sw                                     # in [0, L)
    if sw == 0:
        rolled = pltpu.roll(x, base, axis=1) if base else x
    else:
        near = pltpu.roll(x, base, axis=1)                 # lanes with w >= sw
        far = pltpu.roll(x, (base - W) % L, axis=1)        # lanes with w <  sw
        w_in_row = jax.lax.broadcasted_iota(jnp.int32, (1, L), 1) % W
        rolled = jnp.where(w_in_row < sw, far, near)

    # --- energy = E[rolled, x] via a balanced binary-tree select -------------
    # pair_ref holds E[a*n + b] = val[mul[inv[a], b]] * strength, zero-padded to
    # P = next_pow2(n*n).  Cost: P-1 selects + log2(P) bit tests per site (vs
    # ~2*n^2 for a linear chain).  NOTE (contract difference vs torch advanced
    # indexing): out-of-range group elements read an arbitrary table entry.
    # TODO(synk): stage the n^2 lookup through a packed int8 `coupled` table
    # (4x denser VALU work) once int8 select coverage is verified on all targets.
    pidx = rolled * n_vals + x                             # (TB, L) in [0, n*n)
    P = pair_ref.shape[0]
    nbits = P.bit_length() - 1
    bits = [(pidx & (1 << j)) != 0 for j in range(nbits)]

    def sel(nb, off):
        # Select pair_ref[off + low nb bits of pidx]; depth-first keeps live
        # full-tile temporaries to ~nb.
        if nb == 0:
            return pair_ref[off]
        hi = sel(nb - 1, off + (1 << (nb - 1)))
        lo = sel(nb - 1, off)
        return jnp.where(bits[nb - 1], hi, lo)

    energy = sel(nbits, 0)                                 # (TB, L) f32

    # energy.sum(dims): reduce over all lattice sites.
    if lane_dense_out:
        o_ref[...] = jnp.sum(energy, axis=-1)[None, :]     # (1, TB): batch on lanes
    else:
        o_ref[...] = jnp.sum(energy, axis=-1, keepdims=True)   # (TB, 1)


def twobody_energy(x, val_table, mul_table, inv_table, shifts=(0, 0), strength=1.0):
    """TwoBody.forward(input, lattice, group) for a 2-D lattice.

    x:         (B, H, W) integer configuration.  Any integer dtype is accepted;
               for n <= 127 callers should store int8 upstream to quarter HBM
               traffic (biggest win on v5e) -- the kernel upcasts internally.
    val_table: (n,)   float  group value table (group.default_val_table stand-in)
    mul_table: (n, n) int    group multiplication table (group.mul)
    inv_table: (n,)   int    group inverse table (group.inv)
    shifts:    static (shift_h, shift_w)
    returns:   (B,) float32 energies
    """
    B, H, W = x.shape
    n = int(val_table.shape[0])
    L = H * W
    if n > _TREE_MAX_N:
        # TODO(synk): for n > 8 implement the one-hot formulation: onehot(rolled)
        # @ E on the (idle) MXU, then a masked reduce against onehot(x), so VALU
        # cost scales O(n) instead of O(n^2).
        raise NotImplementedError(
            f"group size {n} > {_TREE_MAX_N}: unrolled tree-select lookup disabled")

    # Fuse group.inv, group.mul, the value lookup and `strength` into one tiny
    # pair-energy table, zero-padded to a power of two for the tree select.
    b_idx = jnp.arange(n, dtype=jnp.int32)
    pair = val_table[mul_table[inv_table[:, None], b_idx[None, :]]] * strength
    pair = pair.reshape(-1).astype(jnp.float32)
    P = _next_pow2(n * n)
    if P > n * n:
        pair = jnp.pad(pair, (0, P - n * n))

    xf = x.reshape(B, L)                        # free reshape -> lane-dense last axis
    TB, lane_dense, vmem_limit = _tile_plan(B, L, xf.dtype.itemsize)
    grid = (pl.cdiv(B, TB),)

    kernel = functools.partial(
        _twobody_kernel, n_vals=n, height=H, width=W,
        shift_h=int(shifts[0]), shift_w=int(shifts[1]), lane_dense_out=lane_dense)

    if lane_dense:
        out_shape = jax.ShapeDtypeStruct((1, B), jnp.float32)
        out_spec = pl.BlockSpec((1, TB), lambda i: (0, i))        # batch on lanes
    else:
        out_shape = jax.ShapeDtypeStruct((B, 1), jnp.float32)
        out_spec = pl.BlockSpec((TB, 1), lambda i: (i, 0))        # big-lattice fallback

    out = pl.pallas_call(
        kernel,
        out_shape=out_shape,
        grid=grid,
        in_specs=[
            # batch-tiled, double-buffered HBM->VMEM input
            pl.BlockSpec((TB, L), lambda i: (i, 0)),
            # Whole pair table as a single SMEM-resident operand (no index_map =>
            # staged once, not copied per grid step); scalar prefetch isn't needed
            # since no index_map depends on its values.
            pl.BlockSpec(memory_space=pltpu.MemorySpace.SMEM),
        ],
        out_specs=out_spec,
        compiler_params=pltpu.CompilerParams(
            dimension_semantics=("parallel",),      # shard batch tiles across TCs
            vmem_limit_bytes=vmem_limit,
        ),
    )(xf, pair)
    return out[0] if lane_dense else out[:, 0]


if __name__ == "__main__":
    key = jax.random.PRNGKey(0)

    # Batch of 8 configurations on a 16x16 2-D lattice of Z4 group elements.
    B, H, W = 8, 16, 16
    n_vals = 4
    strength = -1.5

    # Z_n cyclic-group stand-in for `group` (mul / inv tables).  The value table
    # is intentionally asymmetric so the roll direction is genuinely validated.
    g = jnp.arange(n_vals, dtype=jnp.int32)
    mul_table = (g[:, None] + g[None, :]) % n_vals           # group.mul
    inv_table = (n_vals - g) % n_vals                        # group.inv
    val_table = jnp.array([0.5, 1.25, -0.75, 2.0], jnp.float32)

    x = jax.random.randint(key, (B, H, W), 0, n_vals, dtype=jnp.int32)

    def reference(x, shifts):                                # pure-JAX PyTorch forward
        rolled = jnp.roll(x, shifts, axis=(-2, -1))
        coupled = mul_table[inv_table[rolled], x]
        return (val_table[coupled] * strength).sum(axis=(-2, -1))

    # (1,1) exercises both roll axes; (2,0) the single-flat-roll path; (0,3) the
    # in-row wrap path of the fused roll.
    for shifts in [(1, 1), (2, 0), (0, 3)]:
        out = twobody_energy(x, val_table, mul_table, inv_table,
                             shifts=shifts, strength=strength)
        out = jax.block_until_ready(out)
        ref = reference(x, shifts)
        assert out.shape == (B,)
        assert jnp.allclose(out, ref, rtol=1e-5, atol=1e-3), (shifts, out, ref)

    print("KERNEL_OK")
</pallas_src>

<mosaic_0001>
module attributes {stable_mosaic.version = 11 : i64} {
  func.func @_twobody_kernel(%arg0: i32, %arg1: memref<8x256xi32, #tpu.memory_space<vmem>>, %arg2: memref<16xf32, #tpu.memory_space<smem>>, %arg3: memref<1x8xf32, #tpu.memory_space<vmem>>) attributes {dimension_semantics = [#tpu.dimension_semantics<parallel>], iteration_bounds = array<i64: 1>, scalar_prefetch = 0 : i64, scratch_operands = 0 : i64, tpu.core_type = #tpu.core_type<tc>, window_params = [{transform_indices = @transform_0, window_bounds = array<i64: 8, 256>}, {transform_indices = @transform_1, window_bounds = array<i64: 16>}, {transform_indices = @transform_2, window_bounds = array<i64: 1, 8>}]} {
    %c0 = arith.constant 0 : index
    %c0_0 = arith.constant 0 : index
    %0 = vector.load %arg1[%c0, %c0_0] : memref<8x256xi32, #tpu.memory_space<vmem>>, vector<8x256xi32>
    %c17_i32 = arith.constant 17 : i32
    %1 = tpu.dynamic_rotate %0 by %c17_i32 dim 1 : vector<8x256xi32>, i32 -> vector<8x256xi32>
    %c1_i32 = arith.constant 1 : i32
    %2 = tpu.dynamic_rotate %0 by %c1_i32 dim 1 : vector<8x256xi32>, i32 -> vector<8x256xi32>
    %3 = tpu.iota {dimensions = array<i32: 1>} : vector<1x256xi32>
    %c16_i32 = arith.constant 16 : i32
    %c0_i32 = arith.constant 0 : i32
    %4 = arith.cmpi eq, %c16_i32, %c0_i32 : i32
    %c1_i32_1 = arith.constant 1 : i32
    %5 = arith.select %4, %c1_i32_1, %c16_i32 : i32
    %6 = vector.broadcast %5 : i32 to vector<1x256xi32>
    %7 = arith.remsi %3, %6 : vector<1x256xi32>
    %c0_i32_2 = arith.constant 0 : i32
    %8 = vector.broadcast %c0_i32_2 : i32 to vector<1x256xi32>
    %9 = arith.cmpi ne, %7, %8 : vector<1x256xi32>
    %c0_i32_3 = arith.constant 0 : i32
    %10 = vector.broadcast %c0_i32_3 : i32 to vector<1x256xi32>
    %11 = arith.cmpi slt, %7, %10 : vector<1x256xi32>
    %c0_i32_4 = arith.constant 0 : i32
    %12 = arith.cmpi slt, %5, %c0_i32_4 : i32
    %13 = vector.broadcast %12 : i1 to vector<1x256xi1>
    %14 = vector.broadcast %13 : vector<1x256xi1> to vector<1x256xi1>
    %15 = arith.xori %11, %14 : vector<1x256xi1>
    %16 = arith.andi %15, %9 : vector<1x256xi1>
    %17 = vector.broadcast %5 : i32 to vector<1x256xi32>
    %18 = arith.addi %7, %17 : vector<1x256xi32>
    %19 = arith.select %16, %18, %7 : vector<1x256xi1>, vector<1x256xi32>
    %c1_i32_5 = arith.constant 1 : i32
    %20 = vector.broadcast %c1_i32_5 : i32 to vector<1x256xi32>
    %21 = arith.cmpi slt, %19, %20 : vector<1x256xi32>
    %22 = vector.shape_cast %21 : vector<1x256xi1> to vector<1x256xi1>
    %23 = vector.broadcast %22 : vector<1x256xi1> to vector<8x256xi1>
    %24 = arith.select %23, %2, %1 : vector<8x256xi1>, vector<8x256xi32>
    %c4_i32 = arith.constant 4 : i32
    %25 = vector.broadcast %c4_i32 : i32 to vector<8x256xi32>
    %26 = arith.muli %24, %25 : vector<8x256xi32>
    %27 = arith.addi %26, %0 : vector<8x256xi32>
    %c1_i32_6 = arith.constant 1 : i32
    %28 = vector.broadcast %c1_i32_6 : i32 to vector<8x256xi32>
    %29 = arith.andi %27, %28 : vector<8x256xi32>
    %c0_i32_7 = arith.constant 0 : i32
    %30 = vector.broadcast %c0_i32_7 : i32 to vector<8x256xi32>
    %31 = arith.cmpi ne, %29, %30 : vector<8x256xi32>
    %c2_i32 = arith.constant 2 : i32
    %32 = vector.broadcast %c2_i32 : i32 to vector<8x256xi32>
    %33 = arith.andi %27, %32 : vector<8x256xi32>
    %c0_i32_8 = arith.constant 0 : i32
    %34 = vector.broadcast %c0_i32_8 : i32 to vector<8x256xi32>
    %35 = arith.cmpi ne, %33, %34 : vector<8x256xi32>
    %c4_i32_9 = arith.constant 4 : i32
    %36 = vector.broadcast %c4_i32_9 : i32 to vector<8x256xi32>
    %37 = arith.andi %27, %36 : vector<8x256xi32>
    %c0_i32_10 = arith.constant 0 : i32
    %38 = vector.broadcast %c0_i32_10 : i32 to vector<8x256xi32>
    %39 = arith.cmpi ne, %37, %38 : vector<8x256xi32>
    %c8_i32 = arith.constant 8 : i32
    %40 = vector.broadcast %c8_i32 : i32 to vector<8x256xi32>
    %41 = arith.andi %27, %40 : vector<8x256xi32>
    %c0_i32_11 = arith.constant 0 : i32
    %42 = vector.broadcast %c0_i32_11 : i32 to vector<8x256xi32>
    %43 = arith.cmpi ne, %41, %42 : vector<8x256xi32>
    %c15 = arith.constant 15 : index
    %44 = memref.load %arg2[%c15] : memref<16xf32, #tpu.memory_space<smem>>
    %c14 = arith.constant 14 : index
    %45 = memref.load %arg2[%c14] : memref<16xf32, #tpu.memory_space<smem>>
    %46 = vector.broadcast %44 : f32 to vector<8x256xf32>
    %47 = vector.broadcast %45 : f32 to vector<8x256xf32>
    %48 = arith.select %31, %46, %47 : vector<8x256xi1>, vector<8x256xf32>
    %c13 = arith.constant 13 : index
    %49 = memref.load %arg2[%c13] : memref<16xf32, #tpu.memory_space<smem>>
    %c12 = arith.constant 12 : index
    %50 = memref.load %arg2[%c12] : memref<16xf32, #tpu.memory_space<smem>>
    %51 = vector.broadcast %49 : f32 to vector<8x256xf32>
    %52 = vector.broadcast %50 : f32 to vector<8x256xf32>
    %53 = arith.select %31, %51, %52 : vector<8x256xi1>, vector<8x256xf32>
    %54 = arith.select %35, %48, %53 : vector<8x256xi1>, vector<8x256xf32>
    %c11 = arith.constant 11 : index
    %55 = memref.load %arg2[%c11] : memref<16xf32, #tpu.memory_space<smem>>
    %c10 = arith.constant 10 : index
    %56 = memref.load %arg2[%c10] : memref<16xf32, #tpu.memory_space<smem>>
    %57 = vector.broadcast %55 : f32 to vector<8x256xf32>
    %58 = vector.broadcast %56 : f32 to vector<8x256xf32>
    %59 = arith.select %31, %57, %58 : vector<8x256xi1>, vector<8x256xf32>
    %c9 = arith.constant 9 : index
    %60 = memref.load %arg2[%c9] : memref<16xf32, #tpu.memory_space<smem>>
    %c8 = arith.constant 8 : index
    %61 = memref.load %arg2[%c8] : memref<16xf32, #tpu.memory_space<smem>>
    %62 = vector.broadcast %60 : f32 to vector<8x256xf32>
    %63 = vector.broadcast %61 : f32 to vector<8x256xf32>
    %64 = arith.select %31, %62, %63 : vector<8x256xi1>, vector<8x256xf32>
    %65 = arith.select %35, %59, %64 : vector<8x256xi1>, vector<8x256xf32>
    %66 = arith.select %39, %54, %65 : vector<8x256xi1>, vector<8x256xf32>
    %c7 = arith.constant 7 : index
    %67 = memref.load %arg2[%c7] : memref<16xf32, #tpu.memory_space<smem>>
    %c6 = arith.constant 6 : index
    %68 = memref.load %arg2[%c6] : memref<16xf32, #tpu.memory_space<smem>>
    %69 = vector.broadcast %67 : f32 to vector<8x256xf32>
    %70 = vector.broadcast %68 : f32 to vector<8x256xf32>
    %71 = arith.select %31, %69, %70 : vector<8x256xi1>, vector<8x256xf32>
    %c5 = arith.constant 5 : index
    %72 = memref.load %arg2[%c5] : memref<16xf32, #tpu.memory_space<smem>>
    %c4 = arith.constant 4 : index
    %73 = memref.load %arg2[%c4] : memref<16xf32, #tpu.memory_space<smem>>
    %74 = vector.broadcast %72 : f32 to vector<8x256xf32>
    %75 = vector.broadcast %73 : f32 to vector<8x256xf32>
    %76 = arith.select %31, %74, %75 : vector<8x256xi1>, vector<8x256xf32>
    %77 = arith.select %35, %71, %76 : vector<8x256xi1>, vector<8x256xf32>
    %c3 = arith.constant 3 : index
    %78 = memref.load %arg2[%c3] : memref<16xf32, #tpu.memory_space<smem>>
    %c2 = arith.constant 2 : index
    %79 = memref.load %arg2[%c2] : memref<16xf32, #tpu.memory_space<smem>>
    %80 = vector.broadcast %78 : f32 to vector<8x256xf32>
    %81 = vector.broadcast %79 : f32 to vector<8x256xf32>
    %82 = arith.select %31, %80, %81 : vector<8x256xi1>, vector<8x256xf32>
    %c1 = arith.constant 1 : index
    %83 = memref.load %arg2[%c1] : memref<16xf32, #tpu.memory_space<smem>>
    %c0_12 = arith.constant 0 : index
    %84 = memref.load %arg2[%c0_12] : memref<16xf32, #tpu.memory_space<smem>>
    %85 = vector.broadcast %83 : f32 to vector<8x256xf32>
    %86 = vector.broadcast %84 : f32 to vector<8x256xf32>
    %87 = arith.select %31, %85, %86 : vector<8x256xi1>, vector<8x256xf32>
    %88 = arith.select %35, %82, %87 : vector<8x256xi1>, vector<8x256xf32>
    %89 = arith.select %39, %77, %88 : vector<8x256xi1>, vector<8x256xf32>
    %90 = arith.select %43, %66, %89 : vector<8x256xi1>, vector<8x256xf32>
    %cst = arith.constant dense<0.000000e+00> : vector<8xf32>
    %91 = vector.multi_reduction <add>, %90, %cst [1] : vector<8x256xf32> to vector<8xf32>
    %92 = vector.shape_cast %91 : vector<8xf32> to vector<1x8xf32>
    %c0_13 = arith.constant 0 : index
    %c0_14 = arith.constant 0 : index
    %93 = vector.load %arg3[%c0_13, %c0_14] : memref<1x8xf32, #tpu.memory_space<vmem>>, vector<1x8xf32>
    tpu.vector_store %arg3[%c0_13, %c0_14], %92 {strides = array<i32>} : memref<1x8xf32, #tpu.memory_space<vmem>>, vector<1x8xf32>,
    return
  }
  func.func @transform_0(%arg0: i32) -> (i32, i32) {
    %c0_i32 = arith.constant 0 : i32
    %c0_i32_0 = arith.constant 0 : i32
    return %arg0, %c0_i32 : i32, i32
  }
  func.func @transform_1(%arg0: i32) -> i32 {
    %c0_i32 = arith.constant 0 : i32
    %c0_i32_0 = arith.constant 0 : i32
    return %c0_i32 : i32
  }
  func.func @transform_2(%arg0: i32) -> (i32, i32) {
    %c0_i32 = arith.constant 0 : i32
    %c0_i32_0 = arith.constant 0 : i32
    return %c0_i32, %arg0 : i32, i32
  }
}

</mosaic_0001>

<llo_original>
// kernel: tpu_custom_call.1
$region0: #{tpu_custom_call.1}
  #allocation0 [shape = 'u32[]', space=smem, size = 0x4, offset = 0x4, fixed_abs, tag = 'smem constant byte address 0x4 - core index']
  #allocation1 [shape = 'u32[144,128]{1,0:T(1,128)}', space=vmem, size = 0x12000, scoped, tag = 'internal scratch']
  %s0 = inlined_call_operand.hbm [shape: s32[8,256], index: 0, kind: input, shape index: {}]
  %s1 = inlined_call_operand.vmem [shape: f32[16], index: 1, kind: input, shape index: {}]
  %s2 = inlined_call_operand.hbm [shape: f32[1,8], index: 2, kind: output, shape index: {}]
  %s3 = sld [smem:[#allocation0]]
  $region26: #{tpu_custom_call.1} parent=0
    _
  %s5 = ssub.s32 1, %s3
  %s6 = scalar_select 0, %s5, %s3
  $region1: #{tpu_custom_call.1} parent=0
    #allocation2 [shape = 'u8[8192]{0}', space=vmem, size = 0x2000, scoped, tag = 'input window, operand 0, single buffered']
    #allocation3 [shape = 's32[1]{0}', space=sflag, size = 0x4, scoped, tag = 'scoped memory for tpu_custom_call.1']
    #allocation4 [shape = 's32[1]{0}', space=sflag, size = 0x4, scoped, tag = 'scoped memory for tpu_custom_call.1']
    #allocation5 [shape = 's32[1]{0}', space=sflag, size = 0x4, scoped, tag = 'scoped memory for tpu_custom_call.1']
    #allocation6 [shape = 'u8[512]{0}', space=smem, size = 0x200, scoped, tag = 'input window, operand 1, single buffered']
    #allocation7 [shape = 'u8[512]{0}', space=vmem, size = 0x400, scoped, tag = 'output window, operand 0, single buffered']
    %7 = vsyncpa [#allocation3], 0
    %8 = vsyncpa [#allocation5], 0
    %9 = vsyncpa [#allocation4], 0
    // Predicated region
    $region2: #{tpu_custom_call.1} parent=1 // pred_check
      _
    $region3: #{tpu_custom_call.1} parent=1 // pred_check_branch
      %11 = sbr.rel (0) target = $region5
    $region4: #{tpu_custom_call.1} parent=1 // pred_region
      %s13 = ssub.s32 256, 256
      %14 = vsyncadd [#allocation3], %s13
      %s16 = sshll.u32 [#allocation2], 4
      %s17 = int_to_ptr.vmem [resolvable:$true] %s16
      %19 = dma.hbm_to_vmem [thread:$0]  %s0, 256, %s17, [#allocation3]
    $region5: #{tpu_custom_call.1} parent=1 // pred_fallthru
      _
    // Predicated region
    $region6: #{tpu_custom_call.1} parent=1 // pred_check
      _
    $region7: #{tpu_custom_call.1} parent=1 // pred_check_branch
      %21 = sbr.rel (0) target = $region9
    $region8: #{tpu_custom_call.1} parent=1 // pred_region
      %s23 = ssub.s32 16, 16
      %24 = vsyncadd [#allocation5], %s23
      %s26 = sshll.u32 %s1, 4
      %s27 = int_to_ptr.vmem [resolvable:$true] %s26
      %29 = dma.vmem_to_smem %s27, 16, [#allocation6], [#allocation5]
    $region9: #{tpu_custom_call.1} parent=1 // pred_fallthru
      _
    // Predicated region
    $region10: #{tpu_custom_call.1} parent=1 // pred_check
      _
    $region11: #{tpu_custom_call.1} parent=1 // pred_check_branch
      %31 = sbr.rel (0) target = $region13
    $region12: #{tpu_custom_call.1} parent=1 // pred_region
      %32 = dma.done [#allocation3], 256
    $region13: #{tpu_custom_call.1} parent=1 // pred_fallthru
      _
    // Predicated region
    $region14: #{tpu_custom_call.1} parent=1 // pred_check
      _
    $region15: #{tpu_custom_call.1} parent=1 // pred_check_branch
      %34 = sbr.rel (0) target = $region17
    $region16: #{tpu_custom_call.1} parent=1 // pred_region
      %35 = dma.done [#allocation5], 16
    $region17: #{tpu_custom_call.1} parent=1 // pred_fallthru
      _
    %36 = sfence
    %v37 = vld [vmem:[#allocation2] sm:$0xff]
    %v38 = vld [vmem:[#allocation2 + $0x8] sm:$0xff]
    %39 = vrot.lane.b32.xlu0 %v37, 17
    %v40 = vpop.permute.xlu0 %39
    %41 = vrot.lane.b32.xlu0 %v38, 17
    %v42 = vpop.permute.xlu0 %41
    %v43 = vlaneseq
    %v44 = vand.u32 %v43, 127
    %vm45 = vcmp.lt.s32.totalorder %v44, 17
    %v46 = vsel %vm45, %v40, %v42
    %v47 = vsel %vm45, %v42, %v40
    %48 = vrot.lane.b32.xlu0 %v37, 1
    %v49 = vpop.permute.xlu0 %48
    %50 = vrot.lane.b32.xlu0 %v38, 1
    %v51 = vpop.permute.xlu0 %50
    %vm52 = vcmp.lt.s32.totalorder %v44, 1
    %v53 = vsel %vm52, %v49, %v51
    %v54 = vsel %vm52, %v51, %v49
    %v55 = vadd.s32 %v44, 128
    %vm56 = vcmp.lt.s32.totalorder %v44, 0
    %v57 = vsub.s32 0, %v44
    %v58 = vsel %vm56, %v57, %v44
    %v59 = vshrl.u32 %v58, 4
    %v60 = vand.u32 %v58, 15
    %v61 = vsub.s32 0, %v60
    %v62 = vsel %vm56, %v61, %v60
    %vm63 = vcmp.lt.s32.totalorder %v55, 0
    %v64 = vsub.s32 0, %v55
    %v65 = vsel %vm63, %v64, %v55
    %v66 = vshrl.u32 %v65, 4
    %v67 = vand.u32 %v65, 15
    %v68 = vsub.s32 0, %v67
    %v69 = vsel %vm63, %v68, %v67
    %vm70 = vcmp.ne.s32.totalorder %v62, 0
    %vm71 = vcmp.ne.s32.totalorder %v69, 0
    %vm72 = vcmp.lt.s32.totalorder %v62, 0
    %vm73 = vcmp.lt.s32.totalorder %v69, 0
    %vm74 = vmand %vm72, %vm70
    %vm75 = vmand %vm73, %vm71
    %v76 = vadd.s32 %v62, 16
    %v77 = vadd.s32 %v69, 16
    %v78 = vsel %vm74, %v76, %v62
    %v79 = vsel %vm75, %v77, %v69
    %vm80 = vcmp.lt.s32.totalorder %v78, 1
    %vm81 = vcmp.lt.s32.totalorder %v79, 1
    %v82 = vsel %vm80, 1, 0
    %v83 = vsel %vm81, 1, 0
    %vm84 = vcmp.eq.s32.totalorder %v82, 1
    %vm85 = vcmp.eq.s32.totalorder %v83, 1
    %v86 = vsel %vm84, %v54, %v47
    %v87 = vsel %vm85, %v53, %v46
    %v88 = vmul.u32 %v86, 4
    %v89 = vmul.u32 %v87, 4
    %v90 = vadd.s32 %v88, %v37
    %v91 = vadd.s32 %v89, %v38
    %v92 = vand.u32 %v90, 1
    %v93 = vand.u32 %v91, 1
    %vm94 = vcmp.ne.s32.totalorder %v92, 0
    %vm95 = vcmp.ne.s32.totalorder %v93, 0
    %v96 = vand.u32 %v90, 2
    %v97 = vand.u32 %v91, 2
    %vm98 = vcmp.ne.s32.totalorder %v96, 0
    %vm99 = vcmp.ne.s32.totalorder %v97, 0
    %v100 = vand.u32 %v90, 4
    %v101 = vand.u32 %v91, 4
    %vm102 = vcmp.ne.s32.totalorder %v100, 0
    %vm103 = vcmp.ne.s32.totalorder %v101, 0
    %v104 = vand.u32 %v90, 8
    %v105 = vand.u32 %v91, 8
    %vm106 = vcmp.ne.s32.totalorder %v104, 0
    %vm107 = vcmp.ne.s32.totalorder %v105, 0
    %s108 = sld [smem:[#allocation6 + $0xf]]
    %s109 = sld [smem:[#allocation6 + $0xe]]
    %v110 = vstv %s108
    %v111 = vstv %s109
    %v112 = vsel %vm94, %v110, %v111
    %v113 = vsel %vm95, %v110, %v111
    %s114 = sld [smem:[#allocation6 + $0xd]]
    %s115 = sld [smem:[#allocation6 + $0xc]]
    %v116 = vstv %s114
    %v117 = vstv %s115
    %v118 = vsel %vm94, %v116, %v117
    %v119 = vsel %vm95, %v116, %v117
    %v120 = vsel %vm98, %v112, %v118
    %v121 = vsel %vm99, %v113, %v119
    %s122 = sld [smem:[#allocation6 + $0xb]]
    %s123 = sld [smem:[#allocation6 + $0xa]]
    %v124 = vstv %s122
    %v125 = vstv %s123
    %v126 = vsel %vm94, %v124, %v125
    %v127 = vsel %vm95, %v124, %v125
    %s128 = sld [smem:[#allocation6 + $0x9]]
    %s129 = sld [smem:[#allocation6 + $0x8]]
    %v130 = vstv %s128
    %v131 = vstv %s129
    %v132 = vsel %vm94, %v130, %v131
    %v133 = vsel %vm95, %v130, %v131
    %v134 = vsel %vm98, %v126, %v132
    %v135 = vsel %vm99, %v127, %v133
    %v136 = vsel %vm102, %v120, %v134
    %v137 = vsel %vm103, %v121, %v135
    %s138 = sld [smem:[#allocation6 + $0x7]]
    %s139 = sld [smem:[#allocation6 + $0x6]]
    %v140 = vstv %s138
    %v141 = vstv %s139
    %v142 = vsel %vm94, %v140, %v141
    %v143 = vsel %vm95, %v140, %v141
    %s144 = sld [smem:[#allocation6 + $0x5]]
    %s145 = sld [smem:[#allocation6 + $0x4]]
    %v146 = vstv %s144
    %v147 = vstv %s145
    %v148 = vsel %vm94, %v146, %v147
    %v149 = vsel %vm95, %v146, %v147
    %v150 = vsel %vm98, %v142, %v148
    %v151 = vsel %vm99, %v143, %v149
    %s152 = sld [smem:[#allocation6 + $0x3]]
    %s153 = sld [smem:[#allocation6 + $0x2]]
    %v154 = vstv %s152
    %v155 = vstv %s153
    %v156 = vsel %vm94, %v154, %v155
    %v157 = vsel %vm95, %v154, %v155
    %s158 = sld [smem:[#allocation6 + $0x1]]
    %s159 = sld [smem:[#allocation6]]
    %v160 = vstv %s158
    %v161 = vstv %s159
    %v162 = vsel %vm94, %v160, %v161
    %v163 = vsel %vm95, %v160, %v161
    %v164 = vsel %vm98, %v156, %v162
    %v165 = vsel %vm99, %v157, %v163
    %v166 = vsel %vm102, %v150, %v164
    %v167 = vsel %vm103, %v151, %v165
    %v168 = vsel %vm106, %v136, %v166
    %v169 = vsel %vm107, %v137, %v167
    %v170 = vadd.f32 %v168, %v169
    %171 = vadd.xlane.f32.xlu0 %v170
    %v172 = vpop.xlane.xlu0 %171
    %v174 = vlaneseq
    %v175 = vshrl.u32 %v174, 7
    %v176 = vsub.s32 %v44, %v175
    %v177 = vrot.slane %v172, %v176
    %vm179 = vcmask 57344
    %180 = vst.msk [vmem:[#allocation7] sm:$0x1] %vm179, %v177
    // Predicated region
    $region18: #{tpu_custom_call.1} parent=1 // pred_check
      _
    $region19: #{tpu_custom_call.1} parent=1 // pred_check_branch
      %182 = sbr.rel (0) target = $region21
    $region20: #{tpu_custom_call.1} parent=1 // pred_region
      %s184 = ssub.s32 16, 16
      %185 = vsyncadd [#allocation4], %s184
      %s187 = sshll.u32 [#allocation7], 4
      %s188 = int_to_ptr.vmem [resolvable:$true] %s187
      %190 = dma.vmem_to_hbm [thread:$0]  %s188, 16, %s2, [#allocation4]
    $region21: #{tpu_custom_call.1} parent=1 // pred_fallthru
      _
    // Predicated region
    $region22: #{tpu_custom_call.1} parent=1 // pred_check
      _
    $region23: #{tpu_custom_call.1} parent=1 // pred_check_branch
      %192 = sbr.rel (0) target = $region25
    $region24: #{tpu_custom_call.1} parent=1 // pred_region
      %193 = dma.done [#allocation4], 16
    $region25: #{tpu_custom_call.1} parent=1 // pred_fallthru
      _
    %194 = vsyncpa [#allocation3], 1
    %195 = vsyncpa [#allocation4], 1
    %196 = vsyncpa [#allocation5], 1

</llo_original>
